<compile_context>
chip_gen: v7x
topology: tpu7x:2x2x1
jax: 0.10.0
libtpu: 0.0.40
codegen_flags: <defaults>
</compile_context>

<pallas_src>
import functools

import jax
import jax.numpy as jnp
from jax.experimental import pallas as pl
from jax.experimental.pallas import tpu as pltpu


def gated_causal_conv1d_kernel(x_ref, wt_ref, ws_ref, bt_ref, bs_ref,
                               wr_ref, br_ref, o_ref, prev_ref,
                               *, kernel_size, n_taps, residual):
    # x_ref    : (Cin, Lt)              current (batch-row, L-tile) block, NCL layout
    # wt_ref   : (Cout, n_taps*Cin)     causal-conv weight, tanh half (bf16, im2col-packed)
    # ws_ref   : (Cout, n_taps*Cin)     causal-conv weight, sigmoid half
    # bt_ref   : (Cout, 1)  f32         causal-conv bias, tanh half
    # bs_ref   : (Cout, 1)  f32         causal-conv bias, sigmoid half
    # wr_ref   : (Cout, Cout)           1x1 residual conv weight (bf16)
    # br_ref   : (Cout, 1)  f32         1x1 residual conv bias
    # o_ref    : (Cout, Lt)
    # prev_ref : (Cin, Lt)              previous L-tile (causal history), MXU dtype
    K = kernel_size
    l = pl.program_id(1)

    # First L-tile of each batch row sees zero history (== ConstantPad1d((K-1, 0), 0)).
    @pl.when(l == 0)
    def _():
        prev_ref[...] = jnp.zeros_like(prev_ref)

    x = x_ref[...]                               # (Cin, Lt), input dtype
    cin, lt = x.shape
    xc = x.astype(prev_ref.dtype)                # MXU operand dtype (bf16)
    prev = prev_ref[...]                         # previous tile, same dtype

    lane = jax.lax.broadcasted_iota(jnp.int32, (cin, lt), 1)

    def delayed(d):
        """x delayed by d timesteps, pulling history from the previous tile."""
        if d == 0:
            return xc
        # s[:, j] = prev[:, j] for j >= Lt-d else x[:, j]; rotating s right by d
        # gives tap[:, j] = x[:, j-d] (j >= d) and prev[:, Lt-d+j] (j < d),
        # i.e. exactly jnp.roll(s, d, axis=1).  All operands stay (Cin, Lt).
        s = jnp.where(lane >= lt - d, prev, xc)
        return jnp.concatenate([s[:, lt - d:], s[:, :lt - d]], axis=1)

    # im2col slab: block tau holds every channel delayed by (K-1-tau) steps.
    # For 'causal' masks the zero-weight current-time tap (tau == K-1) is dropped.
    col = jnp.concatenate([delayed(K - 1 - tau) for tau in range(n_taps)], axis=0)

    # Carry this tile forward as the causal history of the next L-tile.
    prev_ref[...] = xc

    # Fused causal conv: two MXU matmuls (tanh / sigmoid halves) so no
    # sublane-misaligned split of the pre-activations when Cout % 8 != 0.
    pre_t = jnp.dot(wt_ref[...], col, preferred_element_type=jnp.float32) + bt_ref[...]
    pre_s = jnp.dot(ws_ref[...], col, preferred_element_type=jnp.float32) + bs_ref[...]

    # Gated activation (EUP): tanh(first half) * sigmoid(second half).
    g = jnp.tanh(pre_t) * jax.nn.sigmoid(pre_s)                     # (Cout, Lt) f32

    # 1x1 residual conv (pointwise matmul, bf16 operands / f32 accumulate) + skip.
    r = jnp.dot(wr_ref[...], g.astype(wr_ref.dtype),
                preferred_element_type=jnp.float32) + br_ref[...]
    if residual:
        r = r + x.astype(jnp.float32)
    o_ref[...] = r.astype(o_ref.dtype)


def _vmem_capacity_bytes():
    """Physical per-core VMEM, with a conservative fallback (v7x floor)."""
    try:
        return int(pltpu.get_tpu_info().vmem_capacity_bytes)
    except Exception:
        return 64 * 1024 * 1024


def _pick_l_tile(L, per_lane_bytes, budget_bytes, max_tile=8192):
    """Largest L-tile: whole L if it fits, else a 128-multiple divisor within budget."""
    cap = min(max_tile, max(128, budget_bytes // max(per_lane_bytes, 1)))
    if L <= cap:
        return L
    cand = (cap // 128) * 128
    while cand >= 128:
        if L % cand == 0:
            return cand
        cand -= 128
    # L has no 128-multiple divisor that fits: take its largest divisor within cap.
    best, d = 1, 1
    while d * d <= L:
        if L % d == 0:
            for c in (d, L // d):
                if c <= cap:
                    best = max(best, c)
        d += 1
    return best


def gated_causal_conv1d(x_ncl, w_conv, b_conv, w_res, b_res, *,
                        kernel_size, mask_type='causal', residual=True,
                        max_block_l=8192, mxu_dtype=jnp.bfloat16):
    """x_ncl: (B, Cin, L) like PyTorch.  Returns (B, Cout, L) in the same layout."""
    B, Cin, L = x_ncl.shape
    two_cout, w_cin, K = w_conv.shape
    cout = two_cout // 2
    assert two_cout == 2 * cout and w_cin == Cin and K == kernel_size
    assert kernel_size >= 2
    if residual:
        assert Cin == cout, "residual path requires in_chs == out_chs"

    n_taps = K - 1 if mask_type == 'causal' else K

    # --- weight repack (tiny, one-time glue) ---------------------------------
    # (2*Cout, Cin, K) -> (2*Cout, K, Cin) -> keep taus 0..n_taps-1 (drop the
    # zeroed current-time tap for 'causal') -> (2*Cout, n_taps*Cin).  Column
    # (tau*Cin + c) multiplies channel c delayed by (K-1-tau) steps, matching
    # the kernel's im2col slab.  Split into tanh / sigmoid halves; cast to bf16.
    w_im2col = jnp.transpose(w_conv, (0, 2, 1))[:, :n_taps, :].reshape(
        two_cout, n_taps * Cin)
    wt = w_im2col[:cout].astype(mxu_dtype)
    ws = w_im2col[cout:].astype(mxu_dtype)
    bt = b_conv[:cout].astype(jnp.float32).reshape(cout, 1)
    bs = b_conv[cout:].astype(jnp.float32).reshape(cout, 1)
    wr = w_res[:, :, 0].astype(mxu_dtype)                    # (Cout, Cout)
    br = b_res.astype(jnp.float32).reshape(cout, 1)

    # --- generation-aware tile / VMEM budgeting ------------------------------
    itemsize = jnp.dtype(x_ncl.dtype).itemsize
    mxu_item = jnp.dtype(mxu_dtype).itemsize
    cap = _vmem_capacity_bytes()                             # 64 MiB on v7x, 128 on v5e/v6e
    vmem_limit = max(32 << 20, min(cap // 2, 64 << 20))
    tile_budget = (vmem_limit * 3) // 4
    # Rough per-lane working set: double-buffered x/out blocks, previous-tile
    # scratch, bf16 im2col slab + temporaries, f32 pre-activations / gate / result.
    per_lane = (Cin * (2 * itemsize + (n_taps + 3) * mxu_item)
                + cout * (3 * itemsize + 16))
    Lt = _pick_l_tile(L, per_lane, tile_budget, max_tile=max_block_l)
    assert L % Lt == 0 and Lt >= kernel_size
    grid = (B, L // Lt)

    kernel = functools.partial(gated_causal_conv1d_kernel,
                               kernel_size=kernel_size, n_taps=n_taps,
                               residual=residual)

    flops = 2 * B * L * (n_taps * Cin * two_cout + cout * cout)
    transcendentals = 2 * B * L * cout
    bytes_accessed = ((Cin + cout) * B * L * itemsize
                      + (wt.size + ws.size + wr.size) * mxu_item
                      + (bt.size + bs.size + br.size) * 4)

    out = pl.pallas_call(
        kernel,
        out_shape=jax.ShapeDtypeStruct((B, cout, L), x_ncl.dtype),
        grid_spec=pltpu.PrefetchScalarGridSpec(
            num_scalar_prefetch=0,
            grid=grid,
            in_specs=[
                pl.BlockSpec((None, Cin, Lt), lambda b, l: (b, 0, l)),
                pl.BlockSpec((cout, n_taps * Cin), lambda b, l: (0, 0)),
                pl.BlockSpec((cout, n_taps * Cin), lambda b, l: (0, 0)),
                pl.BlockSpec((cout, 1), lambda b, l: (0, 0)),
                pl.BlockSpec((cout, 1), lambda b, l: (0, 0)),
                pl.BlockSpec((cout, cout), lambda b, l: (0, 0)),
                pl.BlockSpec((cout, 1), lambda b, l: (0, 0)),
            ],
            out_specs=pl.BlockSpec((None, cout, Lt), lambda b, l: (b, 0, l)),
            scratch_shapes=[pltpu.VMEM((Cin, Lt), mxu_dtype)],
        ),
        compiler_params=pltpu.CompilerParams(
            dimension_semantics=("parallel", "arbitrary"),
            vmem_limit_bytes=vmem_limit),
        cost_estimate=pl.CostEstimate(flops=flops,
                                      transcendentals=transcendentals,
                                      bytes_accessed=bytes_accessed),
    )(x_ncl, wt, ws, bt, bs, wr, br)
    return out


def reference(x_ncl, w_conv, b_conv, w_res, b_res, *,
              kernel_size, mask_type='causal', residual=True):
    """Pure-JAX (f32) reference matching the PyTorch forward exactly."""
    w = w_conv
    if mask_type == 'causal':
        w = w.at[:, :, -1].set(0.0)
    xp = jnp.pad(x_ncl, ((0, 0), (0, 0), (kernel_size - 1, 0)))
    out = jax.lax.conv_general_dilated(
        xp, w, window_strides=(1,), padding='VALID',
        dimension_numbers=('NCH', 'OIH', 'NCH'))
    out = out + b_conv[None, :, None]
    h1, h2 = jnp.split(out, 2, axis=1)
    g = jnp.tanh(h1) * jax.nn.sigmoid(h2)
    r = jax.lax.conv_general_dilated(
        g, w_res, window_strides=(1,), padding='VALID',
        dimension_numbers=('NCH', 'OIH', 'NCH'))
    r = r + b_res[None, :, None]
    if residual:
        r = r + x_ncl
    return r


if __name__ == "__main__":
    def make_inputs(key, B, C, L, K, dtype=jnp.float32):
        kx, kw, kb, kwr, kbr = jax.random.split(key, 5)
        x = jax.random.normal(kx, (B, C, L), dtype=jnp.float32).astype(dtype)
        w1 = jax.random.normal(kw, (2 * C, C, K), dtype=jnp.float32) * 0.3
        b1 = jax.random.normal(kb, (2 * C,), dtype=jnp.float32) * 0.1
        wr = jax.random.normal(kwr, (C, C, 1), dtype=jnp.float32) * 0.3
        br = jax.random.normal(kbr, (C,), dtype=jnp.float32) * 0.1
        return x, w1, b1, wr, br

    # 1) small config matching the module defaults (single L-tile per batch row).
    B, C, L, K = 2, 4, 16, 3
    x, w1, b1, wr, br = make_inputs(jax.random.PRNGKey(0), B, C, L, K)
    out = jax.block_until_ready(
        gated_causal_conv1d(x, w1, b1, wr, br, kernel_size=K,
                            mask_type='causal', residual=True))
    ref = reference(x, w1, b1, wr, br, kernel_size=K,
                    mask_type='causal', residual=True)
    assert out.shape == (B, C, L) and out.dtype == x.dtype
    assert jnp.allclose(out, ref, rtol=6e-2, atol=6e-2), \
        float(jnp.max(jnp.abs(out - ref)))

    # 2) longer sequence exercising the multi-L-tile causal-carry path (grid=(2,2)).
    B2, C2, L2, K2 = 2, 4, 256, 3
    x2, w12, b12, wr2, br2 = make_inputs(jax.random.PRNGKey(1), B2, C2, L2, K2)
    out2 = jax.block_until_ready(
        gated_causal_conv1d(x2, w12, b12, wr2, br2, kernel_size=K2,
                            mask_type='causal', residual=True, max_block_l=128))
    ref2 = reference(x2, w12, b12, wr2, br2, kernel_size=K2,
                     mask_type='causal', residual=True)
    assert jnp.allclose(out2, ref2, rtol=6e-2, atol=6e-2), \
        float(jnp.max(jnp.abs(out2 - ref2)))

    # 3) bf16 x / out end-to-end (halved HBM traffic; the v5e-oriented path).
    B3, C3, L3, K3 = 2, 8, 512, 3
    x3, w13, b13, wr3, br3 = make_inputs(jax.random.PRNGKey(2), B3, C3, L3, K3,
                                         dtype=jnp.bfloat16)
    out3 = jax.block_until_ready(
        gated_causal_conv1d(x3, w13, b13, wr3, br3, kernel_size=K3,
                            mask_type='causal', residual=True, max_block_l=256))
    ref3 = reference(x3.astype(jnp.float32), w13, b13, wr3, br3, kernel_size=K3,
                     mask_type='causal', residual=True)
    assert out3.dtype == jnp.bfloat16
    assert jnp.allclose(out3.astype(jnp.float32), ref3, rtol=1e-1, atol=1e-1), \
        float(jnp.max(jnp.abs(out3.astype(jnp.float32) - ref3)))

    print("KERNEL_OK")
</pallas_src>

<mosaic_0001>
module attributes {stable_mosaic.version = 11 : i64} {
  func.func @gated_causal_conv1d_kernel(%arg0: i32, %arg1: i32, %arg2: memref<1x4x16xf32, #tpu.memory_space<vmem>>, %arg3: memref<4x8xbf16, #tpu.memory_space<vmem>>, %arg4: memref<4x8xbf16, #tpu.memory_space<vmem>>, %arg5: memref<4x1xf32, #tpu.memory_space<vmem>>, %arg6: memref<4x1xf32, #tpu.memory_space<vmem>>, %arg7: memref<4x4xbf16, #tpu.memory_space<vmem>>, %arg8: memref<4x1xf32, #tpu.memory_space<vmem>>, %arg9: memref<1x4x16xf32, #tpu.memory_space<vmem>>, %arg10: memref<4x16xbf16, #tpu.memory_space<vmem>>) attributes {dimension_semantics = [#tpu.dimension_semantics<parallel>, #tpu.dimension_semantics<arbitrary>], iteration_bounds = array<i64: 2, 1>, scalar_prefetch = 0 : i64, scratch_operands = 1 : i64, tpu.core_type = #tpu.core_type<tc>, window_params = [{transform_indices = @transform_0, window_bounds = array<i64: 1, 4, 16>}, {pipeline_mode = #tpu.pipeline_mode<synchronous>, transform_indices = @transform_1, window_bounds = array<i64: 4, 8>}, {pipeline_mode = #tpu.pipeline_mode<synchronous>, transform_indices = @transform_2, window_bounds = array<i64: 4, 8>}, {pipeline_mode = #tpu.pipeline_mode<synchronous>, transform_indices = @transform_3, window_bounds = array<i64: 4, 1>}, {pipeline_mode = #tpu.pipeline_mode<synchronous>, transform_indices = @transform_4, window_bounds = array<i64: 4, 1>}, {pipeline_mode = #tpu.pipeline_mode<synchronous>, transform_indices = @transform_5, window_bounds = array<i64: 4, 4>}, {pipeline_mode = #tpu.pipeline_mode<synchronous>, transform_indices = @transform_6, window_bounds = array<i64: 4, 1>}, {transform_indices = @transform_7, window_bounds = array<i64: 1, 4, 16>}]} {
    %c0_i32 = arith.constant 0 : i32
    %0 = arith.cmpi eq, %arg1, %c0_i32 : i32
    %1 = arith.extui %0 : i1 to i32
    %c0_i32_0 = arith.constant 0 : i32
    %2 = arith.cmpi ne, %1, %c0_i32_0 : i32
    scf.if %2 {
      %cst_25 = arith.constant 0.000000e+00 : bf16
      %49 = vector.broadcast %cst_25 : bf16 to vector<4x16xbf16>
      %c0_26 = arith.constant 0 : index
      %c0_27 = arith.constant 0 : index
      %50 = vector.load %arg10[%c0_26, %c0_27] : memref<4x16xbf16, #tpu.memory_space<vmem>>, vector<4x16xbf16>
      tpu.vector_store %arg10[%c0_26, %c0_27], %49 {strides = array<i32>} : memref<4x16xbf16, #tpu.memory_space<vmem>>, vector<4x16xbf16>,
    } else {
    }
    %c0 = arith.constant 0 : index
    %c0_1 = arith.constant 0 : index
    %c0_2 = arith.constant 0 : index
    %3 = vector.load %arg2[%c0, %c0_1, %c0_2] : memref<1x4x16xf32, #tpu.memory_space<vmem>>, vector<1x4x16xf32>
    %4 = vector.shape_cast %3 : vector<1x4x16xf32> to vector<4x16xf32>
    %5 = arith.truncf %4 : vector<4x16xf32> to vector<4x16xbf16>
    %c0_3 = arith.constant 0 : index
    %c0_4 = arith.constant 0 : index
    %6 = vector.load %arg10[%c0_3, %c0_4] : memref<4x16xbf16, #tpu.memory_space<vmem>>, vector<4x16xbf16>
    %7 = tpu.iota {dimensions = array<i32: 1>} : vector<4x16xi32>
    %c14_i32 = arith.constant 14 : i32
    %8 = vector.broadcast %c14_i32 : i32 to vector<4x16xi32>
    %9 = arith.cmpi sge, %7, %8 : vector<4x16xi32>
    %10 = arith.select %9, %6, %5 : vector<4x16xi1>, vector<4x16xbf16>
    %11 = vector.extract_strided_slice %10 {offsets = [0, 14], sizes = [4, 2], strides = [1, 1]} : vector<4x16xbf16> to vector<4x2xbf16>
    %12 = vector.extract_strided_slice %10 {offsets = [0, 0], sizes = [4, 14], strides = [1, 1]} : vector<4x16xbf16> to vector<4x14xbf16>
    %13 = tpu.concatenate %11, %12 in 1 : vector<4x2xbf16>, vector<4x14xbf16> -> vector<4x16xbf16>
    %c15_i32 = arith.constant 15 : i32
    %14 = vector.broadcast %c15_i32 : i32 to vector<4x16xi32>
    %15 = arith.cmpi sge, %7, %14 : vector<4x16xi32>
    %16 = arith.select %15, %6, %5 : vector<4x16xi1>, vector<4x16xbf16>
    %17 = vector.extract_strided_slice %16 {offsets = [0, 15], sizes = [4, 1], strides = [1, 1]} : vector<4x16xbf16> to vector<4x1xbf16>
    %18 = vector.extract_strided_slice %16 {offsets = [0, 0], sizes = [4, 15], strides = [1, 1]} : vector<4x16xbf16> to vector<4x15xbf16>
    %19 = tpu.concatenate %17, %18 in 1 : vector<4x1xbf16>, vector<4x15xbf16> -> vector<4x16xbf16>
    %20 = tpu.concatenate %13, %19 in 0 : vector<4x16xbf16>, vector<4x16xbf16> -> vector<8x16xbf16>
    %c0_5 = arith.constant 0 : index
    %c0_6 = arith.constant 0 : index
    %21 = vector.load %arg10[%c0_5, %c0_6] : memref<4x16xbf16, #tpu.memory_space<vmem>>, vector<4x16xbf16>
    tpu.vector_store %arg10[%c0_5, %c0_6], %5 {strides = array<i32>} : memref<4x16xbf16, #tpu.memory_space<vmem>>, vector<4x16xbf16>,
    %c0_7 = arith.constant 0 : index
    %c0_8 = arith.constant 0 : index
    %22 = vector.load %arg3[%c0_7, %c0_8] : memref<4x8xbf16, #tpu.memory_space<vmem>>, vector<4x8xbf16>
    %cst = arith.constant dense<0.000000e+00> : vector<4x16xf32>
    %23 = tpu.matmul %22, %20, %cst {dimension_numbers = #tpu.dot_dimension_numbers<[1], [0], [0], [1], [0, 0, 1, 1], [], []>} : vector<4x8xbf16>, vector<8x16xbf16>, vector<4x16xf32> -> vector<4x16xf32>
    %c0_9 = arith.constant 0 : index
    %c0_10 = arith.constant 0 : index
    %24 = vector.load %arg5[%c0_9, %c0_10] : memref<4x1xf32, #tpu.memory_space<vmem>>, vector<4x1xf32>
    %25 = vector.broadcast %24 : vector<4x1xf32> to vector<4x16xf32>
    %26 = arith.addf %23, %25 : vector<4x16xf32>
    %c0_11 = arith.constant 0 : index
    %c0_12 = arith.constant 0 : index
    %27 = vector.load %arg4[%c0_11, %c0_12] : memref<4x8xbf16, #tpu.memory_space<vmem>>, vector<4x8xbf16>
    %cst_13 = arith.constant dense<0.000000e+00> : vector<4x16xf32>
    %28 = tpu.matmul %27, %20, %cst_13 {dimension_numbers = #tpu.dot_dimension_numbers<[1], [0], [0], [1], [0, 0, 1, 1], [], []>} : vector<4x8xbf16>, vector<8x16xbf16>, vector<4x16xf32> -> vector<4x16xf32>
    %c0_14 = arith.constant 0 : index
    %c0_15 = arith.constant 0 : index
    %29 = vector.load %arg6[%c0_14, %c0_15] : memref<4x1xf32, #tpu.memory_space<vmem>>, vector<4x1xf32>
    %30 = vector.broadcast %29 : vector<4x1xf32> to vector<4x16xf32>
    %31 = arith.addf %28, %30 : vector<4x16xf32>
    %32 = math.tanh %26 : vector<4x16xf32>
    %33 = arith.negf %31 : vector<4x16xf32>
    %34 = math.exp %33 : vector<4x16xf32>
    %cst_16 = arith.constant 1.000000e+00 : f32
    %35 = vector.broadcast %cst_16 : f32 to vector<4x16xf32>
    %36 = arith.addf %35, %34 : vector<4x16xf32>
    %37 = arith.divf %35, %36 : vector<4x16xf32>
    %38 = arith.mulf %32, %37 : vector<4x16xf32>
    %c0_17 = arith.constant 0 : index
    %c0_18 = arith.constant 0 : index
    %39 = vector.load %arg7[%c0_17, %c0_18] : memref<4x4xbf16, #tpu.memory_space<vmem>>, vector<4x4xbf16>
    %40 = arith.truncf %38 : vector<4x16xf32> to vector<4x16xbf16>
    %cst_19 = arith.constant dense<0.000000e+00> : vector<4x16xf32>
    %41 = tpu.matmul %39, %40, %cst_19 {dimension_numbers = #tpu.dot_dimension_numbers<[1], [0], [0], [1], [0, 0, 1, 1], [], []>} : vector<4x4xbf16>, vector<4x16xbf16>, vector<4x16xf32> -> vector<4x16xf32>
    %c0_20 = arith.constant 0 : index
    %c0_21 = arith.constant 0 : index
    %42 = vector.load %arg8[%c0_20, %c0_21] : memref<4x1xf32, #tpu.memory_space<vmem>>, vector<4x1xf32>
    %43 = vector.broadcast %42 : vector<4x1xf32> to vector<4x16xf32>
    %44 = arith.addf %41, %43 : vector<4x16xf32>
    %45 = arith.addf %44, %4 : vector<4x16xf32>
    %c0_22 = arith.constant 0 : index
    %c0_23 = arith.constant 0 : index
    %c0_24 = arith.constant 0 : index
    %46 = vector.load %arg9[%c0_22, %c0_23, %c0_24] : memref<1x4x16xf32, #tpu.memory_space<vmem>>, vector<1x4x16xf32>
    %47 = vector.shape_cast %46 : vector<1x4x16xf32> to vector<4x16xf32>
    %48 = vector.shape_cast %45 : vector<4x16xf32> to vector<1x4x16xf32>
    tpu.vector_store %arg9[%c0_22, %c0_23, %c0_24], %48 {strides = array<i32>} : memref<1x4x16xf32, #tpu.memory_space<vmem>>, vector<1x4x16xf32>,
    return
  }
  func.func @transform_0(%arg0: i32, %arg1: i32) -> (i32, i32, i32) {
    %c0_i32 = arith.constant 0 : i32
    %c0_i32_0 = arith.constant 0 : i32
    return %arg0, %c0_i32, %arg1 : i32, i32, i32
  }
  func.func @transform_1(%arg0: i32, %arg1: i32) -> (i32, i32) {
    %c0_i32 = arith.constant 0 : i32
    %c0_i32_0 = arith.constant 0 : i32
    %c0_i32_1 = arith.constant 0 : i32
    return %c0_i32, %c0_i32_0 : i32, i32
  }
  func.func @transform_2(%arg0: i32, %arg1: i32) -> (i32, i32) {
    %c0_i32 = arith.constant 0 : i32
    %c0_i32_0 = arith.constant 0 : i32
    %c0_i32_1 = arith.constant 0 : i32
    return %c0_i32, %c0_i32_0 : i32, i32
  }
  func.func @transform_3(%arg0: i32, %arg1: i32) -> (i32, i32) {
    %c0_i32 = arith.constant 0 : i32
    %c0_i32_0 = arith.constant 0 : i32
    %c0_i32_1 = arith.constant 0 : i32
    return %c0_i32, %c0_i32_0 : i32, i32
  }
  func.func @transform_4(%arg0: i32, %arg1: i32) -> (i32, i32) {
    %c0_i32 = arith.constant 0 : i32
    %c0_i32_0 = arith.constant 0 : i32
    %c0_i32_1 = arith.constant 0 : i32
    return %c0_i32, %c0_i32_0 : i32, i32
  }
  func.func @transform_5(%arg0: i32, %arg1: i32) -> (i32, i32) {
    %c0_i32 = arith.constant 0 : i32
    %c0_i32_0 = arith.constant 0 : i32
    %c0_i32_1 = arith.constant 0 : i32
    return %c0_i32, %c0_i32_0 : i32, i32
  }
  func.func @transform_6(%arg0: i32, %arg1: i32) -> (i32, i32) {
    %c0_i32 = arith.constant 0 : i32
    %c0_i32_0 = arith.constant 0 : i32
    %c0_i32_1 = arith.constant 0 : i32
    return %c0_i32, %c0_i32_0 : i32, i32
  }
  func.func @transform_7(%arg0: i32, %arg1: i32) -> (i32, i32, i32) {
    %c0_i32 = arith.constant 0 : i32
    %c0_i32_0 = arith.constant 0 : i32
    return %arg0, %c0_i32, %arg1 : i32, i32, i32
  }
}

</mosaic_0001>

<llo_original>
// kernel: tpu_custom_call.1
$region0: #{tpu_custom_call.1}
  #allocation0 [shape = 'u32[]', space=smem, size = 0x4, offset = 0x4, fixed_abs, tag = 'smem constant byte address 0x4 - core index']
  #allocation1 [shape = 'u32[144,128]{1,0:T(1,128)}', space=vmem, size = 0x12000, scoped, tag = 'internal scratch']
  #allocation2 [shape = 'bf16[4,16]{1,0:T(4,128)(2,1)}', space=vmem, size = 0x400, scoped, tag = 'scratch operand']
  %s0 = inlined_call_operand.vmem [shape: f32[2,4,16], index: 0, kind: input, shape index: {}]
  %s1 = inlined_call_operand.vmem [shape: bf16[4,8], index: 1, kind: input, shape index: {}]
  %s2 = inlined_call_operand.vmem [shape: bf16[4,8], index: 2, kind: input, shape index: {}]
  %s3 = inlined_call_operand.vmem [shape: f32[4,1], index: 3, kind: input, shape index: {}]
  %s4 = inlined_call_operand.vmem [shape: f32[4,1], index: 4, kind: input, shape index: {}]
  %s5 = inlined_call_operand.vmem [shape: bf16[4,4], index: 5, kind: input, shape index: {}]
  %s6 = inlined_call_operand.vmem [shape: f32[4,1], index: 6, kind: input, shape index: {}]
  %s7 = inlined_call_operand.hbm [shape: f32[2,4,16], index: 7, kind: output, shape index: {}]
  %s8 = sld [smem:[#allocation0]]
  $region65: #{tpu_custom_call.1} parent=0
    _
  %s10 = ssub.s32 1, %s8
  %s11 = scalar_select 0, %s10, %s8
  $region1: #{tpu_custom_call.1} parent=0
    #allocation3 [shape = 'u8[4096]{0}', space=vmem, size = 0x1000, scoped, tag = 'output window, operand 0']
    #allocation4 [shape = 's32[2]{0}', space=sflag, size = 0x8, scoped, tag = 'scoped memory for tpu_custom_call.1']
    %12 = vsyncpa [#allocation4], 0
    %s13 = scalar_lea.sflag [#allocation4], 1
    %14 = vsyncpa %s13, 0
    loop: start=0, step=1, limit=4
    $region2: #{tpu_custom_call.1} parent=1 // loop_pre_header
      _
    $region3: #{tpu_custom_call.1} parent=1 // loop_header
      %s16 = sphi 0, %s20
      %p17 = scmp.ge.s32.totalorder %s16, 4
      %s23 = sphi 0, %s35
      %s24 = sphi 0, %s31
      %s25 = sphi 0, %s23
      %s26 = sphi 0, %s24
      %s27 = sphi 0, %s25
      %s28 = sphi 0, %s26
      %s40 = sphi 0, %s42
      %s43 = sphi 0, %s40
      %s44 = sphi 0, %s43
      %s60 = sphi 0, %s44
      %s64 = sphi 0, %s64
      %s66 = sphi 0, %s64
      %s67 = sphi 0, %s66
      %s81 = sphi 0, %s67
      %s85 = sphi 0, %s85
      %s87 = sphi 0, %s85
      %s88 = sphi 0, %s87
      %s102 = sphi 0, %s88
      %s106 = sphi 0, %s106
      %s108 = sphi 0, %s106
      %s109 = sphi 0, %s108
      %s123 = sphi 0, %s109
      %s127 = sphi 0, %s127
      %s129 = sphi 0, %s127
      %s130 = sphi 0, %s129
      %s144 = sphi 0, %s130
      %s148 = sphi 0, %s148
      %s150 = sphi 0, %s148
      %s151 = sphi 0, %s150
      %s165 = sphi 0, %s151
      %s169 = sphi 0, %s169
      %s171 = sphi 0, %s169
      %s172 = sphi 0, %s171
      %s186 = sphi 0, %s172
      %s194 = sphi 0, %s196
      %s197 = sphi 0, %s194
      %s198 = sphi 0, %s197
      %s214 = sphi 0, %s198
    $region4: #{tpu_custom_call.1} parent=1 // loop_header_branch
      %19 = sbr.rel (%p17) target = $region8
    $region5: #{tpu_custom_call.1} parent=1 // loop_body
      %s21 = ssub.s32 %s16, 1
      %s22 = ssub.s32 %s16, 2
      %s29 = sadd.s32 1, %s24
      %p30 = scmp.ge.s32.totalorder %s29, 1
      %s31 = scalar_select %p30, 0, %s29
      %s32 = sadd.s32 1, %s23
      %s33 = scalar_select %p30, %s32, %s23
      %p34 = scmp.ge.s32.totalorder %s33, 2
      %s35 = scalar_select %p34, 0, %s33
      %s36 = ssub.s32 %s23, %s35
      %s37 = ssub.s32 %s24, %s31
      %s38 = sor.u32 %s36, %s37
      %p39 = scmp.eq.s32.totalorder %s38, 0
      %s41 = sadd.s32 %s40, 1
      %s42 = scalar_select %p39, %s40, %s41
      %p45 = pneg %p39
      %p46 = scmp.eq.s32.totalorder %s16, 1
      %p47 = por %p45, %p46
      %p48 = scmp.ne.s32.totalorder %s40, %s43
      %p49 = scmp.eq.s32.totalorder %s16, 0
      %p50 = por %p48, %p49
      %p51 = scmp.ne.s32.totalorder %s40, %s43
      %p52 = scmp.eq.s32.totalorder %s21, 1
      %p53 = por %p51, %p52
      %p54 = scmp.ne.s32.totalorder %s43, %s44
      %p55 = scmp.eq.s32.totalorder %s21, 0
      %p56 = por %p54, %p55
      %p57 = scmp.ne.s32.totalorder %s43, %s44
      %p58 = scmp.eq.s32.totalorder %s22, 1
      %p59 = por %p57, %p58
      %p61 = scmp.ne.s32.totalorder %s44, %s60
      %p62 = scmp.eq.s32.totalorder %s22, 0
      %p63 = por %p61, %p62
      %s65 = sadd.s32 %s64, 1
      %p68 = scmp.eq.s32.totalorder %s16, 1
      %p69 = scmp.ne.s32.totalorder %s64, %s66
      %p70 = scmp.eq.s32.totalorder %s16, 0
      %p71 = por %p69, %p70
      %p72 = scmp.ne.s32.totalorder %s64, %s66
      %p73 = scmp.eq.s32.totalorder %s21, 1
      %p74 = por %p72, %p73
      %p75 = scmp.ne.s32.totalorder %s66, %s67
      %p76 = scmp.eq.s32.totalorder %s21, 0
      %p77 = por %p75, %p76
      %p78 = scmp.ne.s32.totalorder %s66, %s67
      %p79 = scmp.eq.s32.totalorder %s22, 1
      %p80 = por %p78, %p79
      %p82 = scmp.ne.s32.totalorder %s67, %s81
      %p83 = scmp.eq.s32.totalorder %s22, 0
      %p84 = por %p82, %p83
      %s86 = sadd.s32 %s85, 1
      %p89 = scmp.eq.s32.totalorder %s16, 1
      %p90 = scmp.ne.s32.totalorder %s85, %s87
      %p91 = scmp.eq.s32.totalorder %s16, 0
      %p92 = por %p90, %p91
      %p93 = scmp.ne.s32.totalorder %s85, %s87
      %p94 = scmp.eq.s32.totalorder %s21, 1
      %p95 = por %p93, %p94
      %p96 = scmp.ne.s32.totalorder %s87, %s88
      %p97 = scmp.eq.s32.totalorder %s21, 0
      %p98 = por %p96, %p97
      %p99 = scmp.ne.s32.totalorder %s87, %s88
      %p100 = scmp.eq.s32.totalorder %s22, 1
      %p101 = por %p99, %p100
      %p103 = scmp.ne.s32.totalorder %s88, %s102
      %p104 = scmp.eq.s32.totalorder %s22, 0
      %p105 = por %p103, %p104
      %s107 = sadd.s32 %s106, 1
      %p110 = scmp.eq.s32.totalorder %s16, 1
      %p111 = scmp.ne.s32.totalorder %s106, %s108
      %p112 = scmp.eq.s32.totalorder %s16, 0
      %p113 = por %p111, %p112
      %p114 = scmp.ne.s32.totalorder %s106, %s108
      %p115 = scmp.eq.s32.totalorder %s21, 1
      %p116 = por %p114, %p115
      %p117 = scmp.ne.s32.totalorder %s108, %s109
      %p118 = scmp.eq.s32.totalorder %s21, 0
      %p119 = por %p117, %p118
      %p120 = scmp.ne.s32.totalorder %s108, %s109
      %p121 = scmp.eq.s32.totalorder %s22, 1
      %p122 = por %p120, %p121
      %p124 = scmp.ne.s32.totalorder %s109, %s123
      %p125 = scmp.eq.s32.totalorder %s22, 0
      %p126 = por %p124, %p125
      %s128 = sadd.s32 %s127, 1
      %p131 = scmp.eq.s32.totalorder %s16, 1
      %p132 = scmp.ne.s32.totalorder %s127, %s129
      %p133 = scmp.eq.s32.totalorder %s16, 0
      %p134 = por %p132, %p133
      %p135 = scmp.ne.s32.totalorder %s127, %s129
      %p136 = scmp.eq.s32.totalorder %s21, 1
      %p137 = por %p135, %p136
      %p138 = scmp.ne.s32.totalorder %s129, %s130
      %p139 = scmp.eq.s32.totalorder %s21, 0
      %p140 = por %p138, %p139
      %p141 = scmp.ne.s32.totalorder %s129, %s130
      %p142 = scmp.eq.s32.totalorder %s22, 1
      %p143 = por %p141, %p142
      %p145 = scmp.ne.s32.totalorder %s130, %s144
      %p146 = scmp.eq.s32.totalorder %s22, 0
      %p147 = por %p145, %p146
      %s149 = sadd.s32 %s148, 1
      %p152 = scmp.eq.s32.totalorder %s16, 1
      %p153 = scmp.ne.s32.totalorder %s148, %s150
      %p154 = scmp.eq.s32.totalorder %s16, 0
      %p155 = por %p153, %p154
      %p156 = scmp.ne.s32.totalorder %s148, %s150
      %p157 = scmp.eq.s32.totalorder %s21, 1
      %p158 = por %p156, %p157
      %p159 = scmp.ne.s32.totalorder %s150, %s151
      %p160 = scmp.eq.s32.totalorder %s21, 0
      %p161 = por %p159, %p160
      %p162 = scmp.ne.s32.totalorder %s150, %s151
      %p163 = scmp.eq.s32.totalorder %s22, 1
      %p164 = por %p162, %p163
      %p166 = scmp.ne.s32.totalorder %s151, %s165
      %p167 = scmp.eq.s32.totalorder %s22, 0
      %p168 = por %p166, %p167
      %s170 = sadd.s32 %s169, 1
      %p173 = scmp.eq.s32.totalorder %s16, 1
      %p174 = scmp.ne.s32.totalorder %s169, %s171
      %p175 = scmp.eq.s32.totalorder %s16, 0
      %p176 = por %p174, %p175
      %p177 = scmp.ne.s32.totalorder %s169, %s171
      %p178 = scmp.eq.s32.totalorder %s21, 1
      %p179 = por %p177, %p178
      %p180 = scmp.ne.s32.totalorder %s171, %s172
      %p181 = scmp.eq.s32.totalorder %s21, 0
      %p182 = por %p180, %p181
      %p183 = scmp.ne.s32.totalorder %s171, %s172
      %p184 = scmp.eq.s32.totalorder %s22, 1
      %p185 = por %p183, %p184
      %p187 = scmp.ne.s32.totalorder %s172, %s186
      %p188 = scmp.eq.s32.totalorder %s22, 0
      %p189 = por %p187, %p188
      %s190 = ssub.s32 %s23, %s35
      %s191 = ssub.s32 %s24, %s31
      %s192 = sor.u32 %s190, %s191
      %p193 = scmp.eq.s32.totalorder %s192, 0
      %s195 = sadd.s32 %s194, 1
      %s196 = scalar_select %p193, %s194, %s195
      %p199 = pneg %p193
      %p200 = scmp.eq.s32.totalorder %s16, 1
      %p201 = por %p199, %p200
      %p202 = scmp.ne.s32.totalorder %s194, %s197
      %p203 = scmp.eq.s32.totalorder %s16, 0
      %p204 = por %p202, %p203
      %p205 = scmp.ne.s32.totalorder %s194, %s197
      %p206 = scmp.eq.s32.totalorder %s21, 1
      %p207 = por %p205, %p206
      %p208 = scmp.ne.s32.totalorder %s197, %s198
      %p209 = scmp.eq.s32.totalorder %s21, 0
      %p210 = por %p208, %p209
      %p211 = scmp.ne.s32.totalorder %s197, %s198
      %p212 = scmp.eq.s32.totalorder %s22, 1
      %p213 = por %p211, %p212
      %p215 = scmp.ne.s32.totalorder %s198, %s214
      %p216 = scmp.eq.s32.totalorder %s22, 0
      %p217 = por %p215, %p216
      %p218 = scmp.le.s32.totalorder 1, %s16
      %p219 = scmp.lt.s32.totalorder %s16, 3
      %p220 = pnand %p218, %p219
      %p221 = pneg %p220
      // Predicated region
      $region9: #{tpu_custom_call.1} parent=5 // pred_check
        _
      $region10: #{tpu_custom_call.1} parent=5 // pred_check_branch
        %223 = sbr.rel (%p220) target = $region12
      $region11: #{tpu_custom_call.1} parent=5 // pred_region
        %s224 = ssub.s32 %s16, 1
        // Predicated region
        $region13: #{tpu_custom_call.1} parent=11 // pred_check
          %p225 = pneg %p77
        $region14: #{tpu_custom_call.1} parent=11 // pred_check_branch
          %227 = sbr.rel (%p225) target = $region16
        $region15: #{tpu_custom_call.1} parent=11 // pred_region
          _
        $region16: #{tpu_custom_call.1} parent=11 // pred_fallthru
          _
        // Predicated region
        $region17: #{tpu_custom_call.1} parent=11 // pred_check
          %p228 = pneg %p98
        $region18: #{tpu_custom_call.1} parent=11 // pred_check_branch
          %230 = sbr.rel (%p228) target = $region20
        $region19: #{tpu_custom_call.1} parent=11 // pred_region
          _
        $region20: #{tpu_custom_call.1} parent=11 // pred_fallthru
          _
        // Predicated region
        $region21: #{tpu_custom_call.1} parent=11 // pred_check
          %p231 = pneg %p119
        $region22: #{tpu_custom_call.1} parent=11 // pred_check_branch
          %233 = sbr.rel (%p231) target = $region24
        $region23: #{tpu_custom_call.1} parent=11 // pred_region
          _
        $region24: #{tpu_custom_call.1} parent=11 // pred_fallthru
          _
        // Predicated region
        $region25: #{tpu_custom_call.1} parent=11 // pred_check
          %p234 = pneg %p140
        $region26: #{tpu_custom_call.1} parent=11 // pred_check_branch
          %236 = sbr.rel (%p234) target = $region28
        $region27: #{tpu_custom_call.1} parent=11 // pred_region
          _
        $region28: #{tpu_custom_call.1} parent=11 // pred_fallthru
          _
        // Predicated region
        $region29: #{tpu_custom_call.1} parent=11 // pred_check
          %p237 = pneg %p161
        $region30: #{tpu_custom_call.1} parent=11 // pred_check_branch
          %239 = sbr.rel (%p237) target = $region32
        $region31: #{tpu_custom_call.1} parent=11 // pred_region
          _
        $region32: #{tpu_custom_call.1} parent=11 // pred_fallthru
          _
        // Predicated region
        $region33: #{tpu_custom_call.1} parent=11 // pred_check
          %p240 = pneg %p182
        $region34: #{tpu_custom_call.1} parent=11 // pred_check_branch
          %242 = sbr.rel (%p240) target = $region36
        $region35: #{tpu_custom_call.1} parent=11 // pred_region
          _
        $region36: #{tpu_custom_call.1} parent=11 // pred_fallthru
          _
      $region12: #{tpu_custom_call.1} parent=5 // pred_fallthru
        _
      %p243 = scmp.lt.s32.totalorder %s16, 2
      // Predicated region
      $region37: #{tpu_custom_call.1} parent=5 // pred_check
        %p244 = pneg %p243
      $region38: #{tpu_custom_call.1} parent=5 // pred_check_branch
        %246 = sbr.rel (%p244) target = $region40
      $region39: #{tpu_custom_call.1} parent=5 // pred_region
        // Predicated region
        $region41: #{tpu_custom_call.1} parent=39 // pred_check
          %p247 = pneg %p50
        $region42: #{tpu_custom_call.1} parent=39 // pred_check_branch
          %249 = sbr.rel (%p247) target = $region44
        $region43: #{tpu_custom_call.1} parent=39 // pred_region
          %p250 = scmp.lt.s32.totalorder %s23, 1
          %s251 = scalar_select %p250, %s23, 1
          %p252 = scmp.lt.s32.totalorder %s24, 0
          %s253 = scalar_select %p252, %s24, 0
          %s254 = sadd.s32 %s253, %s251
          %s255 = smul.addr %s254, 4
          %s256 = scalar_lea.vmem %s0, %s255
        $region44: #{tpu_custom_call.1} parent=39 // pred_fallthru
          _
      $region40: #{tpu_custom_call.1} parent=5 // pred_fallthru
        _
      %p257 = scmp.le.s32.totalorder 1, %s16
      %p258 = scmp.lt.s32.totalorder %s16, 3
      %p259 = pnand %p257, %p258
      %p260 = pneg %p259
      // Predicated region
      $region45: #{tpu_custom_call.1} parent=5 // pred_check
        _
      $region46: #{tpu_custom_call.1} parent=5 // pred_check_branch
        %262 = sbr.rel (%p259) target = $region48
      $region47: #{tpu_custom_call.1} parent=5 // pred_region
        %s263 = ssub.s32 %s16, 1
        %p264 = scmp.lt.s32.totalorder %s25, 1
        %s265 = scalar_select %p264, %s25, 1
        %p266 = scmp.lt.s32.totalorder %s26, 0
        %s267 = scalar_select %p266, %s26, 0
        %s268 = sadd.s32 %s267, %s265
        %s269 = smul.addr %s268, 4
        %s270 = scalar_lea.vmem %s0, %s269
        %p271 = pneg %p56
        %p272 = pneg %p53
        %p273 = pneg %p77
        %p274 = pneg %p74
        %p275 = pneg %p98
        %p276 = pneg %p95
        %p277 = pneg %p119
        %p278 = pneg %p116
        %p279 = pneg %p140
        %p280 = pneg %p137
        %p281 = pneg %p161
        %p282 = pneg %p158
        %p283 = pneg %p182
        %p284 = pneg %p179
        %p285 = pneg %p210
        %p286 = pneg %p207
        %s287 = sand.u32 %s197, 1
        %s288 = scalar_lea.sflag [#allocation4], %s287
        %s289 = sand.u32 %s197, 1
        %s290 = smul.addr %s289, 4
        %s291 = scalar_lea.vmem [#allocation3], %s290
        %p292 = scmp.lt.s32.totalorder %s25, 1
        %s293 = scalar_select %p292, %s25, 1
        %p294 = scmp.lt.s32.totalorder %s26, 0
        %s295 = scalar_select %p294, %s26, 0
        %s296 = sadd.s32 %s295, %s293
        %s297 = smul.addr %s296, 4
        %s298 = scalar_lea.vmem %s0, %s297
        %p301 = scmp.eq.s32.totalorder %s26, 0
        // Predicated region
        $region49: #{tpu_custom_call.1} parent=47 // pred_check
          %p302 = pneg %p301
        $region50: #{tpu_custom_call.1} parent=47 // pred_check_branch
          %304 = sbr.rel (%p302) target = $region52
        $region51: #{tpu_custom_call.1} parent=47 // pred_region
          %vm305 = vcmask 123904
          %306 = vst.msk [vmem:[#allocation2] sm:$0x3] %vm305, 0
        $region52: #{tpu_custom_call.1} parent=47 // pred_fallthru
          _
        %v307 = vld [vmem:[%s298] sm:$0xf]
        %v308 = vpack.c.bf16 %v307, %v307
        %v309 = vld [vmem:[#allocation2] sm:$0x3]
        %v310 = vlaneseq
        %v311 = vand.u32 %v310, 127
        %vm312 = vcmp.ge.s32.totalorder %v311, 14
        %v313 = vsel %vm312, 1, 0
        %v314 = vpack.c.b16 %v313, %v313
        %vm315 = vcmp.ne.s16.totalorder %v314, 0
        %v316 = vsel %vm315, %v309, %v308
        %v319 = vunpack.c.l.s4 1983009808
        %v320 = vunpack.c.0.s8 %v319
        %v321 = vlaneseq
        %v322 = vshrl.u32 %v321, 7
        %v323 = vsub.s32 %v320, %v322
        %v324 = vrot.slane %v316, %v323
        %325 = vrot.lane.b32.xlu0 %v324, 114
        %v326 = vpop.permute.xlu0 %325
        %327 = vrot.lane.b32.xlu0 %v324, 2
        %v328 = vpop.permute.xlu0 %327
        %vm329 = vcmask 15360
        %v332 = vsel %vm329, %v326, %v328
        %vm333 = vcmp.ge.s32.totalorder %v311, 15
        %v334 = vsel %vm333, 1, 0
        %v335 = vpack.c.b16 %v334, %v334
        %vm336 = vcmp.ne.s16.totalorder %v335, 0
        %v337 = vsel %vm336, %v309, %v308
        %v340 = vunpack.c.l.s4 1983009808
        %v341 = vunpack.c.0.s8 %v340
        %v342 = vlaneseq
        %v343 = vshrl.u32 %v342, 7
        %v344 = vsub.s32 %v341, %v343
        %v345 = vrot.slane %v337, %v344
        %346 = vrot.lane.b32.xlu0 %v345, 113
        %v347 = vpop.permute.xlu0 %346
        %348 = vrot.lane.b32.xlu0 %v345, 1
        %v349 = vpop.permute.xlu0 %348
        %vm350 = vcmask 7168
        %v353 = vsel %vm350, %v347, %v349
        %v355 = vrot.slane %v353, 6
        %vm356 = vcmask 1041408
        %v358 = vsel %vm356, %v332, %v355
        %vm359 = vcmask 123904
        %360 = vst.msk [vmem:[#allocation2] sm:$0x3] %vm359, %v308
        %v361 = vld [vmem:[%s1] sm:$0x3]
        %v362 = vld [vmem:[%s3] sm:$0xf]
        %364 = vset.pattern.permute.xlu0 0
        %365 = vperm.xlu0 %364, %v362
        %v366 = vpop.permute.xlu0 %365
        %vm368 = vcmask 64512
        %v370 = vsel %vm368, %v361, 0
        %vm372 = vcmask 1043456
        %v373 = vsel %vm372, %v358, 0
        %375 = vmatprep.subr.bf16.mxu0 0
        %376 = vmatpush1.bf16.msra.mxu0 %v373
        %377 = vmatprep.subr.bf16.mxu0 0
        %378 = vmatpush1.bf16.msra.mxu0 0
        %379 = vmatprep.subr.bf16.mxu0 0
        %380 = vmatpush1.bf16.msra.mxu0 0
        %381 = vmatprep.subr.bf16.mxu0 0
        %382 = vmatpush1.bf16.msra.mxu0 0
        %383 = vmatprep.subr.bf16.mxu0 0
        %384 = vmatpush1.bf16.msra.mxu0 0
        %385 = vmatprep.subr.bf16.mxu0 0
        %386 = vmatpush1.bf16.msra.mxu0 0
        %387 = vmatprep.subr.bf16.mxu0 0
        %388 = vmatpush1.bf16.msra.mxu0 0
        %389 = vmatprep.subr.bf16.mxu0 0
        %390 = vmatpush1.bf16.msra.mxu0 0
        %391 = vmatprep.subr.bf16.mxu0 0
        %392 = vmatpush1.bf16.msra.mxu0 0
        %393 = vmatprep.subr.bf16.mxu0 0
        %394 = vmatpush1.bf16.msra.mxu0 0
        %395 = vmatprep.subr.bf16.mxu0 0
        %396 = vmatpush1.bf16.msra.mxu0 0
        %397 = vmatprep.subr.bf16.mxu0 0
        %398 = vmatpush1.bf16.msra.mxu0 0
        %399 = vmatprep.subr.bf16.mxu0 0
        %400 = vmatpush1.bf16.msra.mxu0 0
        %401 = vmatprep.subr.bf16.mxu0 0
        %402 = vmatpush1.bf16.msra.mxu0 0
        %403 = vmatprep.subr.bf16.mxu0 0
        %404 = vmatpush1.bf16.msra.mxu0 0
        %405 = vmatprep.subr.bf16.mxu0 0
        %406 = vmatpush1.bf16.msra.mxu0 0
        %407 = vmatprep.mubr.bf16.mxu0 0
        %408 = vmatmul.mubr.bf16.gmra.mrb[0].mxu0 %v370
        %v409 = vpop.f32.mrb[0].mxu0
        %v410 = vadd.f32 %v366, %v409
        %v411 = vpop.f32.mrb[0].mxu0
        %v412 = vpop.f32.mrb[0].mxu0
        %v413 = vpop.f32.mrb[0].mxu0
        %414 = vdwg.mxu0
        %v415 = vld [vmem:[%s2] sm:$0x3]
        %v416 = vld [vmem:[%s4] sm:$0xf]
        %418 = vset.pattern.permute.xlu0 0
        %419 = vperm.xlu0 %418, %v416
        %v420 = vpop.permute.xlu0 %419
        %v423 = vsel %vm368, %v415, 0
        %425 = vmatprep.subr.bf16.mxu0 0
        %426 = vmatpush1.bf16.msra.mxu0 %v373
        %427 = vmatprep.subr.bf16.mxu0 0
        %428 = vmatpush1.bf16.msra.mxu0 0
        %429 = vmatprep.subr.bf16.mxu0 0
        %430 = vmatpush1.bf16.msra.mxu0 0
        %431 = vmatprep.subr.bf16.mxu0 0
        %432 = vmatpush1.bf16.msra.mxu0 0
        %433 = vmatprep.subr.bf16.mxu0 0
        %434 = vmatpush1.bf16.msra.mxu0 0
        %435 = vmatprep.subr.bf16.mxu0 0
        %436 = vmatpush1.bf16.msra.mxu0 0
        %437 = vmatprep.subr.bf16.mxu0 0
        %438 = vmatpush1.bf16.msra.mxu0 0
        %439 = vmatprep.subr.bf16.mxu0 0
        %440 = vmatpush1.bf16.msra.mxu0 0
        %441 = vmatprep.subr.bf16.mxu0 0
        %442 = vmatpush1.bf16.msra.mxu0 0
        %443 = vmatprep.subr.bf16.mxu0 0
        %444 = vmatpush1.bf16.msra.mxu0 0
        %445 = vmatprep.subr.bf16.mxu0 0
        %446 = vmatpush1.bf16.msra.mxu0 0
        %447 = vmatprep.subr.bf16.mxu0 0
        %448 = vmatpush1.bf16.msra.mxu0 0
        %449 = vmatprep.subr.bf16.mxu0 0
        %450 = vmatpush1.bf16.msra.mxu0 0
        %451 = vmatprep.subr.bf16.mxu0 0
        %452 = vmatpush1.bf16.msra.mxu0 0
        %453 = vmatprep.subr.bf16.mxu0 0
        %454 = vmatpush1.bf16.msra.mxu0 0
        %455 = vmatprep.subr.bf16.mxu0 0
        %456 = vmatpush1.bf16.msra.mxu0 0
        %457 = vmatprep.mubr.bf16.mxu0 0
        %458 = vmatmul.mubr.bf16.gmra.mrb[0].mxu0 %v423
        %v459 = vpop.f32.mrb[0].mxu0
        %v460 = vadd.f32 %v420, %v459
        %v461 = vpop.f32.mrb[0].mxu0
        %v462 = vpop.f32.mrb[0].mxu0
        %v463 = vpop.f32.mrb[0].mxu0
        %464 = vdwg.mxu0
        %v465 = vtanh.pop %v410
        %v466 = vxor.u32 %v460, 2147483648
        %v467 = vmul.f32 %v466, 1.442695
        %v468 = vpow.pop %v467
        %v469 = vadd.f32 %v468, 1.0
        %v470 = vrcp.pop %v469
        %v471 = vmul.f32 1.0, %v470
        %v472 = vmul.f32 %v465, %v471
        %v473 = vld [vmem:[%s5] sm:$0x3]
        %v474 = vpack.c.bf16 %v472, %v472
        %v475 = vld [vmem:[%s6] sm:$0xf]
        %477 = vset.pattern.permute.xlu0 0
        %478 = vperm.xlu0 %477, %v475
        %v479 = vpop.permute.xlu0 %478
        %vm481 = vcmask 31744
        %v483 = vsel %vm481, %v473, 0
        %v486 = vsel %vm356, %v474, 0
        %488 = vmatprep.subr.bf16.mxu0 0
        %489 = vmatpush1.bf16.msra.mxu0 %v486
        %490 = vmatprep.subr.bf16.mxu0 0
        %491 = vmatpush1.bf16.msra.mxu0 0
        %492 = vmatprep.subr.bf16.mxu0 0
        %493 = vmatpush1.bf16.msra.mxu0 0
        %494 = vmatprep.subr.bf16.mxu0 0
        %495 = vmatpush1.bf16.msra.mxu0 0
        %496 = vmatprep.subr.bf16.mxu0 0
        %497 = vmatpush1.bf16.msra.mxu0 0
        %498 = vmatprep.subr.bf16.mxu0 0
        %499 = vmatpush1.bf16.msra.mxu0 0
        %500 = vmatprep.subr.bf16.mxu0 0
        %501 = vmatpush1.bf16.msra.mxu0 0
        %502 = vmatprep.subr.bf16.mxu0 0
        %503 = vmatpush1.bf16.msra.mxu0 0
        %504 = vmatprep.subr.bf16.mxu0 0
        %505 = vmatpush1.bf16.msra.mxu0 0
        %506 = vmatprep.subr.bf16.mxu0 0
        %507 = vmatpush1.bf16.msra.mxu0 0
        %508 = vmatprep.subr.bf16.mxu0 0
        %509 = vmatpush1.bf16.msra.mxu0 0
        %510 = vmatprep.subr.bf16.mxu0 0
        %511 = vmatpush1.bf16.msra.mxu0 0
        %512 = vmatprep.subr.bf16.mxu0 0
        %513 = vmatpush1.bf16.msra.mxu0 0
        %514 = vmatprep.subr.bf16.mxu0 0
        %515 = vmatpush1.bf16.msra.mxu0 0
        %516 = vmatprep.subr.bf16.mxu0 0
        %517 = vmatpush1.bf16.msra.mxu0 0
        %518 = vmatprep.subr.bf16.mxu0 0
        %519 = vmatpush1.bf16.msra.mxu0 0
        %520 = vmatprep.mubr.bf16.mxu0 0
        %521 = vmatmul.mubr.bf16.gmra.mrb[0].mxu0 %v483
        %v522 = vpop.f32.mrb[0].mxu0
        %v523 = vadd.f32 %v479, %v522
        %v524 = vpop.f32.mrb[0].mxu0
        %v525 = vpop.f32.mrb[0].mxu0
        %v526 = vpop.f32.mrb[0].mxu0
        %527 = vdwg.mxu0
        %v528 = vadd.f32 %v523, %v307
        %vm529 = vcmask 125952
        %530 = vst.msk [vmem:[%s291] sm:$0xf] %vm529, %v528
        %s531 = sand.u32 %s197, 1
        %s532 = scalar_lea.sflag [#allocation4], %s531
        %s533 = sand.u32 %s197, 1
        %s534 = smul.addr %s533, 4
        %s535 = scalar_lea.vmem [#allocation3], %s534
        // Predicated region
        $region53: #{tpu_custom_call.1} parent=47 // pred_check
          %p536 = pneg %p207
        $region54: #{tpu_custom_call.1} parent=47 // pred_check_branch
          %538 = sbr.rel (%p536) target = $region56
        $region55: #{tpu_custom_call.1} parent=47 // pred_region
          %s540 = ssub.s32 64, 64
          %541 = vsyncadd %s532, %s540
          %s542 = sadd.s32 %s26, %s25
          %s543 = smul.addr %s542, 64
          %s544 = scalar_lea.hbm %s7, %s543
          %s546 = sshll.u32 %s535, 4
          %s547 = int_to_ptr.vmem [resolvable:$true] %s546
          %549 = dma.vmem_to_hbm [thread:$0]  %s547, 64, %s544, %s532
        $region56: #{tpu_custom_call.1} parent=47 // pred_fallthru
          _
      $region48: #{tpu_custom_call.1} parent=5 // pred_fallthru
        _
      %p550 = scmp.le.s32.totalorder 2, %s16
      // Predicated region
      $region57: #{tpu_custom_call.1} parent=5 // pred_check
        %p551 = pneg %p550
      $region58: #{tpu_custom_call.1} parent=5 // pred_check_branch
        %553 = sbr.rel (%p551) target = $region60
      $region59: #{tpu_custom_call.1} parent=5 // pred_region
        %s554 = ssub.s32 %s16, 2
        // Predicated region
        $region61: #{tpu_custom_call.1} parent=59 // pred_check
          %p555 = pneg %p213
        $region62: #{tpu_custom_call.1} parent=59 // pred_check_branch
          %557 = sbr.rel (%p555) target = $region64
        $region63: #{tpu_custom_call.1} parent=59 // pred_region
          %s558 = sand.u32 %s198, 1
          %s559 = scalar_lea.sflag [#allocation4], %s558
          %s560 = sand.u32 %s198, 1
          %s561 = smul.addr %s560, 4
          %s562 = scalar_lea.vmem [#allocation3], %s561
          %563 = dma.done %s559, 64
        $region64: #{tpu_custom_call.1} parent=59 // pred_fallthru
          _
      $region60: #{tpu_custom_call.1} parent=5 // pred_fallthru
        _
    $region6: #{tpu_custom_call.1} parent=1 // loop_footer
      %s20 = sadd.s32 1, %s16
    $region7: #{tpu_custom_call.1} parent=1 // loop_footer_branch
      %15 = sbr.rel target = $region3
    $region8: #{tpu_custom_call.1} parent=1 // loop_exit
      _
    %564 = vsyncpa [#allocation4], 1
    %s565 = scalar_lea.sflag [#allocation4], 1
    %566 = vsyncpa %s565, 1

</llo_original>
